<compile_context>
chip_gen: v5e
topology: v5e:2x2
jax: 0.10.0
libtpu: 0.0.40
codegen_flags: <defaults>
</compile_context>

<pallas_src>
import math

import jax
import jax.numpy as jnp
from jax.experimental import pallas as pl
from jax.experimental.pallas import tpu as pltpu

_LANE = 128
_TARGET_BLOCK_BYTES = 2 * 1024 * 1024      # ~2 MiB per block (x4 with in+out double-buffering)
_VMEM_LIMIT_BYTES = 32 * 1024 * 1024


def _cross_config_attention_kernel(inv_temp_ref, x_ref, o_ref):
    # inv_temp_ref: SMEM scalar-prefetch ref, shape (1,), holds 1/temperature
    # x_ref / o_ref: VMEM tiles, either (N, tile_r, 128) or (N, tile_m)
    inv_t = inv_temp_ref[0]
    x = x_ref[...]
    n = x.shape[0]

    xf = x.astype(jnp.float32)               # single cast, reused below
    z = xf * inv_t                            # x / temperature as a multiply

    if xf.ndim == 3:
        # (N, tile_r, 128): the batch axis is the leading (non-tiled) axis,
        # so the softmax reduction unrolls into a chain of VPU elementwise
        # ops over whole lane-dense vregs (no XLU sublane reduce).
        m = z[0]
        for i in range(1, n):
            m = jnp.maximum(m, z[i])
        p = jnp.exp(z - m)                    # broadcasts (tile_r,128) over N
        denom = p[0]
        for i in range(1, n):
            denom = denom + p[i]
    else:
        # (N, tile_m): batch axis is the sublane axis; use keepdims reductions.
        m = jnp.max(z, axis=0, keepdims=True)
        p = jnp.exp(z - m)
        denom = jnp.sum(p, axis=0, keepdims=True)

    # Exact division (kernel is HBM-bound; approximate reciprocal buys nothing
    # here and costs accuracy).
    scores = p / denom
    o_ref[...] = (xf * scores).astype(o_ref.dtype)


def _pick_tile_r(n, r, itemsize):
    """Rows (of 128 lanes) per block for the (N, R, 128) layout."""
    rows = _TARGET_BLOCK_BYTES // (n * _LANE * itemsize)
    if rows >= r:
        return r                               # one block spans the whole row axis
    rows = max(8, (rows // 8) * 8)             # keep sublane tiling 8-aligned
    if rows >= r:
        return r
    return rows


def _pick_tile_m(n, m, itemsize):
    """Lane-columns per block for the 2-D (N, M) layout (multiple of 128)."""
    cols = _TARGET_BLOCK_BYTES // max(1, n * itemsize)
    cols = max(_LANE, (cols // _LANE) * _LANE)
    m_up = pl.cdiv(m, _LANE) * _LANE           # never exceed one ragged block
    return min(cols, m_up)


def cross_config_attention(x, temperature):
    """x: (N, ...) float array. temperature: scalar parameter."""
    orig_shape = x.shape
    N = orig_shape[0]
    M = math.prod(orig_shape[1:])
    itemsize = jnp.dtype(x.dtype).itemsize

    # 1/temperature on the host: the vector path then uses a multiply.
    inv_temp = (1.0 / jnp.asarray(temperature, dtype=jnp.float32)).reshape((1,))

    cparams = pltpu.CompilerParams(
        dimension_semantics=("parallel",),
        vmem_limit_bytes=_VMEM_LIMIT_BYTES)

    if M % _LANE == 0:
        # Lane-dense (N, R, 128) layout; ragged final block (R % tile_r != 0)
        # is masked by Pallas -- no padding, no output slice.
        R = M // _LANE
        x3 = x.reshape(N, R, _LANE)
        tile_r = _pick_tile_r(N, R, itemsize)
        out = pl.pallas_call(
            _cross_config_attention_kernel,
            out_shape=jax.ShapeDtypeStruct((N, R, _LANE), x.dtype),
            grid_spec=pltpu.PrefetchScalarGridSpec(
                num_scalar_prefetch=1,
                grid=(pl.cdiv(R, tile_r),),
                in_specs=[pl.BlockSpec((N, tile_r, _LANE), lambda i, it: (0, i, 0))],
                out_specs=pl.BlockSpec((N, tile_r, _LANE), lambda i, it: (0, i, 0)),
            ),
            compiler_params=cparams,
        )(inv_temp, x3)
        return out.reshape(orig_shape)

    # Fallback for M % 128 != 0: 2-D (N, M) layout with a 128-multiple lane
    # tile; the ragged final block is masked by Pallas (overhang columns are
    # independent under the per-position softmax and never stored).
    x2 = x.reshape(N, M)
    tile_m = _pick_tile_m(N, M, itemsize)
    out2 = pl.pallas_call(
        _cross_config_attention_kernel,
        out_shape=jax.ShapeDtypeStruct((N, M), x.dtype),
        grid_spec=pltpu.PrefetchScalarGridSpec(
            num_scalar_prefetch=1,
            grid=(pl.cdiv(M, tile_m),),
            in_specs=[pl.BlockSpec((N, tile_m), lambda i, it: (0, i))],
            out_specs=pl.BlockSpec((N, tile_m), lambda i, it: (0, i)),
        ),
        compiler_params=cparams,
    )(inv_temp, x2)
    return out2.reshape(orig_shape)


def _reference(x, temperature):
    scores = jax.nn.softmax(x / temperature, axis=0)
    return x * scores


if __name__ == "__main__":
    key = jax.random.PRNGKey(0)
    # Deterministic "parameter" init, matching nn.Parameter(torch.tensor(0.5))
    temperature = jnp.float32(0.5)

    # Main case: feature size is a multiple of 128 -> (N, R, 128) path.
    x = jax.random.normal(key, (2, 4, 16, 16), dtype=jnp.float32)
    out = cross_config_attention(x, temperature)
    out = jax.block_until_ready(out)
    ref = _reference(x, temperature)
    assert out.shape == x.shape
    assert jnp.allclose(out, ref, atol=1e-5, rtol=1e-5), (
        float(jnp.max(jnp.abs(out - ref))))

    # Ragged case: feature size NOT a multiple of 128 -> 2-D masked path.
    key2 = jax.random.PRNGKey(1)
    x2 = jax.random.normal(key2, (3, 5, 7, 9), dtype=jnp.float32)
    out2 = cross_config_attention(x2, temperature)
    out2 = jax.block_until_ready(out2)
    ref2 = _reference(x2, temperature)
    assert out2.shape == x2.shape
    assert jnp.allclose(out2, ref2, atol=1e-5, rtol=1e-5), (
        float(jnp.max(jnp.abs(out2 - ref2))))

    print("KERNEL_OK")
</pallas_src>

<mosaic_0001>
module attributes {stable_mosaic.version = 11 : i64} {
  func.func @_cross_config_attention_kernel(%arg0: i32, %arg1: memref<1xf32, #tpu.memory_space<smem>>, %arg2: memref<2x8x128xf32, #tpu.memory_space<vmem>>, %arg3: memref<2x8x128xf32, #tpu.memory_space<vmem>>) attributes {dimension_semantics = [#tpu.dimension_semantics<parallel>], iteration_bounds = array<i64: 1>, scalar_prefetch = 1 : i64, scratch_operands = 0 : i64, tpu.core_type = #tpu.core_type<tc>, window_params = [{transform_indices = @transform_0, window_bounds = array<i64: 2, 8, 128>}, {transform_indices = @transform_1, window_bounds = array<i64: 2, 8, 128>}]} {
    %c0 = arith.constant 0 : index
    %0 = memref.load %arg1[%c0] : memref<1xf32, #tpu.memory_space<smem>>
    %c0_0 = arith.constant 0 : index
    %c0_1 = arith.constant 0 : index
    %c0_2 = arith.constant 0 : index
    %1 = vector.load %arg2[%c0_0, %c0_1, %c0_2] : memref<2x8x128xf32, #tpu.memory_space<vmem>>, vector<2x8x128xf32>
    %2 = vector.broadcast %0 : f32 to vector<2x8x128xf32>
    %3 = arith.mulf %1, %2 : vector<2x8x128xf32>
    %4 = vector.extract_strided_slice %3 {offsets = [0, 0, 0], sizes = [1, 8, 128], strides = [1, 1, 1]} : vector<2x8x128xf32> to vector<1x8x128xf32>
    %5 = vector.shape_cast %4 : vector<1x8x128xf32> to vector<8x128xf32>
    %6 = vector.extract_strided_slice %3 {offsets = [1, 0, 0], sizes = [1, 8, 128], strides = [1, 1, 1]} : vector<2x8x128xf32> to vector<1x8x128xf32>
    %7 = vector.shape_cast %6 : vector<1x8x128xf32> to vector<8x128xf32>
    %8 = arith.maximumf %5, %7 : vector<8x128xf32>
    %9 = vector.shape_cast %8 : vector<8x128xf32> to vector<1x8x128xf32>
    %10 = vector.broadcast %9 : vector<1x8x128xf32> to vector<2x8x128xf32>
    %11 = arith.subf %3, %10 : vector<2x8x128xf32>
    %12 = math.exp %11 : vector<2x8x128xf32>
    %13 = vector.extract_strided_slice %12 {offsets = [0, 0, 0], sizes = [1, 8, 128], strides = [1, 1, 1]} : vector<2x8x128xf32> to vector<1x8x128xf32>
    %14 = vector.shape_cast %13 : vector<1x8x128xf32> to vector<8x128xf32>
    %15 = vector.extract_strided_slice %12 {offsets = [1, 0, 0], sizes = [1, 8, 128], strides = [1, 1, 1]} : vector<2x8x128xf32> to vector<1x8x128xf32>
    %16 = vector.shape_cast %15 : vector<1x8x128xf32> to vector<8x128xf32>
    %17 = arith.addf %14, %16 : vector<8x128xf32>
    %18 = vector.shape_cast %17 : vector<8x128xf32> to vector<1x8x128xf32>
    %19 = vector.broadcast %18 : vector<1x8x128xf32> to vector<2x8x128xf32>
    %20 = arith.divf %12, %19 : vector<2x8x128xf32>
    %21 = arith.mulf %1, %20 : vector<2x8x128xf32>
    %c0_3 = arith.constant 0 : index
    %c0_4 = arith.constant 0 : index
    %c0_5 = arith.constant 0 : index
    %22 = vector.load %arg3[%c0_3, %c0_4, %c0_5] : memref<2x8x128xf32, #tpu.memory_space<vmem>>, vector<2x8x128xf32>
    tpu.vector_store %arg3[%c0_3, %c0_4, %c0_5], %21 {strides = array<i32>} : memref<2x8x128xf32, #tpu.memory_space<vmem>>, vector<2x8x128xf32>,
    return
  }
  func.func @transform_0(%arg0: i32, %arg1: memref<1xf32, #tpu.memory_space<smem>>) -> (i32, i32, i32) {
    %c0_i32 = arith.constant 0 : i32
    %c0_i32_0 = arith.constant 0 : i32
    %c0_i32_1 = arith.constant 0 : i32
    return %c0_i32, %arg0, %c0_i32_0 : i32, i32, i32
  }
  func.func @transform_1(%arg0: i32, %arg1: memref<1xf32, #tpu.memory_space<smem>>) -> (i32, i32, i32) {
    %c0_i32 = arith.constant 0 : i32
    %c0_i32_0 = arith.constant 0 : i32
    %c0_i32_1 = arith.constant 0 : i32
    return %c0_i32, %arg0, %c0_i32_0 : i32, i32, i32
  }
}

</mosaic_0001>

<llo_original>
// kernel: tpu_custom_call.1
$region0: #{tpu_custom_call.1}
  #allocation0 [shape = 'u32[]', space=smem, size = 0x4, offset = 0x4, fixed_abs, tag = 'smem constant byte address 0x4 - core index']
  #allocation1 [shape = 'u32[72,128]{1,0:T(1,128)}', space=vmem, size = 0x9000, scoped, tag = 'internal scratch']
  #allocation2 [shape = 's32[1]{0}', space=sflag, size = 0x4, scoped, tag = 'scoped memory for tpu_custom_call.1']
  #allocation3 [shape = 'f32[1]{0:T(128)S(6)}', space=smem, size = 0x200, scoped, tag = 'prefetched SMEM operand 0']
  %s0 = inlined_call_operand.<no memory space> [shape: f32[1], index: 0, kind: input, shape index: {}]
  %s1 = inlined_call_operand.hbm [shape: f32[2,8,128], index: 1, kind: input, shape index: {}]
  %s2 = inlined_call_operand.hbm [shape: f32[2,8,128], index: 2, kind: output, shape index: {}]
  %s3 = sld [smem:[#allocation0]]
  $region18: #{tpu_custom_call.1} parent=0
    _
  %s5 = ssub.s32 1, %s3
  %s6 = scalar_select 0, %s5, %s3
  %7 = sst [smem:[#allocation3]] %s0
  $region1: #{tpu_custom_call.1} parent=0
    #allocation4 [shape = 'u8[8192]{0}', space=vmem, size = 0x2000, scoped, tag = 'input window, operand 1, single buffered']
    #allocation5 [shape = 's32[1]{0}', space=sflag, size = 0x4, scoped, tag = 'scoped memory for tpu_custom_call.1']
    #allocation6 [shape = 's32[1]{0}', space=sflag, size = 0x4, scoped, tag = 'scoped memory for tpu_custom_call.1']
    #allocation7 [shape = 'u8[8192]{0}', space=vmem, size = 0x2000, scoped, tag = 'output window, operand 0, single buffered']
    %8 = vsyncpa [#allocation5], 0
    %9 = vsyncpa [#allocation6], 0
    // Predicated region
    $region2: #{tpu_custom_call.1} parent=1 // pred_check
      _
    $region3: #{tpu_custom_call.1} parent=1 // pred_check_branch
      %11 = sbr.rel (0) target = $region5
    $region4: #{tpu_custom_call.1} parent=1 // pred_region
      %13 = vsyncadd [#allocation5], 0
      %s14 = sshll.u32 %s1, 4
      %s15 = int_to_ptr.hbm [resolvable:$true] %s14
      %s16 = sshll.u32 [#allocation4], 4
      %s17 = int_to_ptr.vmem [resolvable:$true] %s16
      %22 = dma.hbm_to_vmem [thread:$0]  %s15, 256, %s17, [#allocation5], 128, 128, 8
    $region5: #{tpu_custom_call.1} parent=1 // pred_fallthru
      _
    // Predicated region
    $region6: #{tpu_custom_call.1} parent=1 // pred_check
      _
    $region7: #{tpu_custom_call.1} parent=1 // pred_check_branch
      %24 = sbr.rel (0) target = $region9
    $region8: #{tpu_custom_call.1} parent=1 // pred_region
      %26 = dma.done [#allocation5], 256
    $region9: #{tpu_custom_call.1} parent=1 // pred_fallthru
      _
    %s27 = sld [smem:[#allocation3]]
    %v28 = vld [vmem:[#allocation4] sm:$0xff]
    %v29 = vld [vmem:[#allocation4 + $0x8] sm:$0xff]
    %v30 = vstv %s27
    %v31 = vmul.f32 %v28, %v30
    %v32 = vmul.f32 %v29, %v30
    %v33 = vmax.f32 %v31, %v32
    %v34 = vsub.f32 %v31, %v33
    %v35 = vsub.f32 %v32, %v33
    %v36 = vmul.f32 %v34, 1.442695
    %v37 = vpow.pop %v36
    %v38 = vmul.f32 %v35, 1.442695
    %v39 = vpow.pop %v38
    %v40 = vadd.f32 %v37, %v39
    %v41 = vrcp.pop %v40
    %v42 = vmul.f32 %v40, %v41
    %v43 = vsub.f32 1.0, %v42
    %v44 = vmul.f32 %v41, %v43
    %v45 = vadd.f32 %v41, %v44
    %vm46 = vweird.f32 %v40
    %vm47 = vweird.f32 %v41
    %vm48 = vmor %vm46, %vm47
    %v49 = vsel %vm48, %v41, %v45
    %v50 = vand.u32 2147483647, %v40
    %vm51 = vcmp.eq.f32.partialorder %v50, 8.507059e+37
    %v52 = vand.u32 %v40, 2147483648
    %v53 = vor.u32 1.1754944e-38, %v52
    %v54 = vsel %vm51, %v53, %v49
    %v55 = vmul.f32 %v37, %v54
    %v56 = vmul.f32 %v39, %v54
    %v57 = vmul.f32 %v28, %v55
    %v58 = vmul.f32 %v29, %v56
    %59 = vst [vmem:[#allocation7] sm:$0xff] %v57
    %60 = vst [vmem:[#allocation7 + $0x8] sm:$0xff] %v58
    // Predicated region
    $region10: #{tpu_custom_call.1} parent=1 // pred_check
      _
    $region11: #{tpu_custom_call.1} parent=1 // pred_check_branch
      %62 = sbr.rel (0) target = $region13
    $region12: #{tpu_custom_call.1} parent=1 // pred_region
      %64 = vsyncadd [#allocation6], 0
      %s65 = sshll.u32 [#allocation7], 4
      %s66 = int_to_ptr.vmem [resolvable:$true] %s65
      %s67 = sshll.u32 %s2, 4
      %s68 = int_to_ptr.hbm [resolvable:$true] %s67
      %73 = dma.vmem_to_hbm [thread:$0]  %s66, 256, %s68, [#allocation6], 128, 128, 8
    $region13: #{tpu_custom_call.1} parent=1 // pred_fallthru
      _
    // Predicated region
    $region14: #{tpu_custom_call.1} parent=1 // pred_check
      _
    $region15: #{tpu_custom_call.1} parent=1 // pred_check_branch
      %75 = sbr.rel (0) target = $region17
    $region16: #{tpu_custom_call.1} parent=1 // pred_region
      %77 = dma.done [#allocation6], 256
    $region17: #{tpu_custom_call.1} parent=1 // pred_fallthru
      _
    %78 = vsyncpa [#allocation5], 1
    %79 = vsyncpa [#allocation6], 1

</llo_original>
